<compile_context>
chip_gen: v6e
topology: v6e:2x2x1
jax: 0.10.0
libtpu: 0.0.40
codegen_flags: <defaults>
</compile_context>

<pallas_src>
import functools

import numpy as np

import jax
import jax.numpy as jnp
from jax.experimental import pallas as pl
from jax.experimental.pallas import tpu as pltpu

# constants from cal_reward's default args (self.alpha / self.beta are unused
# in the reference forward pass)
_REWARD_ALPHA = 0.8
_REWARD_BETA = 1.0

_LANES = 128
_NS_LANES = 3 * _LANES          # 384: 128 (rtt, loss, tp) triples per slab row
_MAX_BLOCK_ROWS = 4096          # 6 MiB (ns) + 2 MiB (pred) per pipeline buffer
_NUM_CORE_SPLITS = 2            # v7x: 2 TensorCores; tiny extra loop on v5e/v6e
_SMALL_N = 8192                 # TODO(synk): re-tune XLA/Pallas crossover per TPU generation


def _reward_mse_jnp(reward_predict, network_states_real, available_resources):
    """Pure-jnp reference / small-N fused-XLA path (two-pass, exact semantics)."""
    pred = reward_predict.astype(jnp.float32)
    ns = network_states_real.astype(jnp.float32)
    avail = jnp.asarray(available_resources, dtype=jnp.float32)
    loss = _REWARD_ALPHA * (ns[:, 2] - avail) ** 2 + _REWARD_BETA * ns[:, 0]
    reward_real = jnp.mean(loss)
    return jnp.mean((pred - reward_real) ** 2)


_reward_mse_xla = jax.jit(_reward_mse_jnp)


def _reward_partials_kernel(avail_ref, m_rtt_ref, m_tp_ref, ns_ref, pred_ref,
                            loss_out, p_out, p2_out, *, rows_valid, blocks_per_core):
    # avail_ref : SMEM (1, 1) f32   -- available_resources
    # m_*_ref   : VMEM (1, 384) f32 -- column-select masks, pre-scaled by beta/alpha
    # ns_ref    : VMEM (br, 384) f32
    # pred_ref  : VMEM (br, 128) f32
    # loss_out  : VMEM (8, 384) f32 -- per-core partial sums, resident accumulators
    # p_out     : VMEM (8, 128) f32
    # p2_out    : VMEM (8, 128) f32
    c = pl.program_id(0)            # core-split index (v7x: one per TensorCore)
    i = pl.program_id(1)            # row-block index within this core's range

    @pl.when(i == 0)
    def _init():
        loss_out[...] = jnp.zeros_like(loss_out)
        p_out[...] = jnp.zeros_like(p_out)
        p2_out[...] = jnp.zeros_like(p2_out)

    br = ns_ref.shape[0]
    g = c * blocks_per_core + i     # global (unclamped) row-block number
    row = jax.lax.broadcasted_iota(jnp.int32, (br, 1), 0)
    valid = (g * br + row) < rows_valid     # masks OOB edge rows and clamped re-reads

    avail = avail_ref[0, 0]

    # network_states contribution: per element x with column c in (rtt, loss, tp):
    #   contrib = beta*x if c==0, alpha*(x - avail)^2 if c==2, else 0
    x = ns_ref[...]                                             # (br, 384)
    d = x - avail
    contrib = m_tp_ref[...] * (d * d) + m_rtt_ref[...] * x
    contrib = jnp.where(valid, contrib, 0.0)
    # leading-axis sum -> pure VPU vreg adds into the resident (8, 384) accumulator
    loss_out[...] += jnp.sum(contrib.reshape(-1, 8, _NS_LANES), axis=0)

    # reward_predict contribution: running sum(p) and sum(p^2)
    p = jnp.where(valid, pred_ref[...], 0.0)                    # (br, 128)
    p_out[...] += jnp.sum(p.reshape(-1, 8, _LANES), axis=0)
    p2_out[...] += jnp.sum((p * p).reshape(-1, 8, _LANES), axis=0)


@functools.partial(jax.jit, static_argnames=("max_block_rows",))
def _reward_mse_pallas(reward_predict, network_states_real, available_resources,
                       max_block_rows=_MAX_BLOCK_ROWS):
    n = reward_predict.shape[0]
    pred = reward_predict.astype(jnp.float32).reshape(-1)
    ns = network_states_real.astype(jnp.float32)
    avail = jnp.asarray(available_resources, dtype=jnp.float32)

    rows = n // _LANES
    if rows < 8:
        # too small for one aligned tile; just let XLA fuse it
        return _reward_mse_jnp(reward_predict, network_states_real, available_resources)

    main_n = rows * _LANES

    # Kernel-facing lane-dense views: one reshape per operand, no column slices,
    # no padding.  TODO(synk): verify in HLO these stay copy-free.
    ns_main = ns[:main_n].reshape(rows, _NS_LANES)      # (rows, 384)
    pred_main = pred[:main_n].reshape(rows, _LANES)     # (rows, 128)

    # Column-select masks (trace-time constants, already scaled by beta/alpha).
    cols = np.arange(_NS_LANES) % 3
    m_rtt = jnp.asarray((cols == 0) * _REWARD_BETA, dtype=jnp.float32).reshape(1, _NS_LANES)
    m_tp = jnp.asarray((cols == 2) * _REWARD_ALPHA, dtype=jnp.float32).reshape(1, _NS_LANES)

    br = min(max_block_rows, (rows // 8) * 8)           # multiple of 8, <= rows
    nb = pl.cdiv(rows, br)                              # total row-blocks
    bpc = pl.cdiv(nb, _NUM_CORE_SPLITS)                 # row-blocks per core split

    def data_map(c, i):
        # clamp spurious trailing blocks (their contribution is masked to 0 in-kernel)
        return (jnp.minimum(c * bpc + i, nb - 1), 0)

    kernel = functools.partial(_reward_partials_kernel,
                               rows_valid=rows, blocks_per_core=bpc)

    loss_part, p_part, p2_part = pl.pallas_call(
        kernel,
        out_shape=(
            jax.ShapeDtypeStruct((_NUM_CORE_SPLITS, 8, _NS_LANES), jnp.float32),
            jax.ShapeDtypeStruct((_NUM_CORE_SPLITS, 8, _LANES), jnp.float32),
            jax.ShapeDtypeStruct((_NUM_CORE_SPLITS, 8, _LANES), jnp.float32),
        ),
        grid=(_NUM_CORE_SPLITS, bpc),
        in_specs=[
            pl.BlockSpec(memory_space=pltpu.MemorySpace.SMEM),        # avail (1, 1)
            pl.BlockSpec((1, _NS_LANES), lambda c, i: (0, 0)),        # m_rtt
            pl.BlockSpec((1, _NS_LANES), lambda c, i: (0, 0)),        # m_tp
            pl.BlockSpec((br, _NS_LANES), data_map),                  # ns slab
            pl.BlockSpec((br, _LANES), data_map),                     # pred slab
        ],
        out_specs=(
            pl.BlockSpec((None, 8, _NS_LANES), lambda c, i: (c, 0, 0)),
            pl.BlockSpec((None, 8, _LANES), lambda c, i: (c, 0, 0)),
            pl.BlockSpec((None, 8, _LANES), lambda c, i: (c, 0, 0)),
        ),
        compiler_params=pltpu.CompilerParams(
            dimension_semantics=("parallel", "arbitrary"),
            vmem_limit_bytes=48 * 1024 * 1024,
        ),
    )(avail.reshape(1, 1), m_rtt, m_tp, ns_main, pred_main)

    loss_sum = jnp.sum(loss_part)
    p_sum = jnp.sum(p_part)
    p2_sum = jnp.sum(p2_part)

    # Ragged tail (< 128 rows): fused XLA, negligible traffic.
    if main_n < n:
        ns_tail = ns[main_n:]
        pred_tail = pred[main_n:]
        loss_sum = loss_sum + jnp.sum(
            _REWARD_ALPHA * (ns_tail[:, 2] - avail) ** 2 + _REWARD_BETA * ns_tail[:, 0])
        p_sum = p_sum + jnp.sum(pred_tail)
        p2_sum = p2_sum + jnp.sum(pred_tail * pred_tail)

    inv_n = 1.0 / n                 # static constant, no per-tile divides
    r = loss_sum * inv_n            # reward_real = mean(loss)
    mean_p = p_sum * inv_n
    mean_p2 = p2_sum * inv_n
    # single-pass expanded MSE: mean((p - r)^2) = E[p^2] - 2*r*E[p] + r^2
    return mean_p2 - 2.0 * r * mean_p + r * r


def reward_mse(reward_predict, network_states_real, available_resources):
    n = int(reward_predict.shape[0])
    if n < _SMALL_N:
        return _reward_mse_xla(reward_predict, network_states_real,
                               available_resources)
    return _reward_mse_pallas(reward_predict, network_states_real,
                              available_resources)


def reward_loss_forward(reward_predict, network_states_real,
                        available_resources: float, switch_threshold=0.5):
    """Matches RewardLoss.forward: returns the MSE if it exceeds the threshold,
    otherwise returns reward_predict unchanged."""
    mse = reward_mse(reward_predict, network_states_real, available_resources)
    # Single host sync: the data-dependent branch (different return shapes)
    # must be resolved on the host, exactly like PyTorch's `if mse > threshold:`.
    mse_val = float(mse)
    if mse_val > switch_threshold:
        print('  noswitch loss: ', mse_val)
        return mse
    return reward_predict


def _assert_close(a, b, rtol=2e-4, atol=1e-6):
    a = float(a)
    b = float(b)
    assert abs(a - b) <= atol + rtol * abs(b), (a, b)


if __name__ == "__main__":
    key = jax.random.PRNGKey(0)
    k1, k2, k3, k4 = jax.random.split(key, 4)
    available_resources = 0.3

    # --- Pallas path: exact 128-multiple N, one block per core-split ---------
    N1 = 4096
    ns1 = jax.random.uniform(k1, (N1, 3), dtype=jnp.float32)
    pred1 = jax.random.uniform(k2, (N1,), dtype=jnp.float32)
    mse1 = _reward_mse_pallas(pred1, ns1, available_resources)
    jax.block_until_ready(mse1)
    _assert_close(mse1, _reward_mse_xla(pred1, ns1, available_resources))

    # --- Pallas path: ragged N (wrapper tail) + default blocks (partial edge) -
    N2 = 20000
    ns2 = jax.random.uniform(k3, (N2, 3), dtype=jnp.float32)
    pred2 = jax.random.uniform(k4, (N2,), dtype=jnp.float32)
    mse2 = _reward_mse_pallas(pred2, ns2, available_resources)
    jax.block_until_ready(mse2)
    _assert_close(mse2, _reward_mse_xla(pred2, ns2, available_resources))

    # --- Pallas path: small blocks -> multi-step grid per core-split ---------
    mse3 = _reward_mse_pallas(pred2, ns2, available_resources, max_block_rows=16)
    jax.block_until_ready(mse3)
    _assert_close(mse3, _reward_mse_xla(pred2, ns2, available_resources))

    # --- Full forward (host-resolved branch), both branch outcomes -----------
    out_a = reward_loss_forward(pred2, ns2, available_resources,
                                switch_threshold=0.5)     # returns reward_predict
    jax.block_until_ready(out_a)
    out_b = reward_loss_forward(pred2, ns2, available_resources,
                                switch_threshold=0.01)    # returns (and prints) the MSE
    jax.block_until_ready(out_b)

    # --- Small-N fast path (fused XLA, no kernel launch) ----------------------
    out_small = reward_loss_forward(pred1[:8], ns1[:8], available_resources,
                                    switch_threshold=10.0)
    jax.block_until_ready(out_small)

    print("KERNEL_OK")
</pallas_src>

<mosaic_0001>
module attributes {stable_mosaic.version = 11 : i64} {
  func.func @_reward_partials_kernel(%arg0: i32, %arg1: i32, %arg2: memref<1x1xf32, #tpu.memory_space<smem>>, %arg3: memref<1x384xf32, #tpu.memory_space<vmem>>, %arg4: memref<1x384xf32, #tpu.memory_space<vmem>>, %arg5: memref<32x384xf32, #tpu.memory_space<vmem>>, %arg6: memref<32x128xf32, #tpu.memory_space<vmem>>, %arg7: memref<1x8x384xf32, #tpu.memory_space<vmem>>, %arg8: memref<1x8x128xf32, #tpu.memory_space<vmem>>, %arg9: memref<1x8x128xf32, #tpu.memory_space<vmem>>) attributes {dimension_semantics = [#tpu.dimension_semantics<parallel>, #tpu.dimension_semantics<arbitrary>], iteration_bounds = array<i64: 2, 1>, scalar_prefetch = 0 : i64, scratch_operands = 0 : i64, tpu.core_type = #tpu.core_type<tc>, window_params = [{transform_indices = @transform_0, window_bounds = array<i64: 1, 1>}, {pipeline_mode = #tpu.pipeline_mode<synchronous>, transform_indices = @transform_1, window_bounds = array<i64: 1, 384>}, {pipeline_mode = #tpu.pipeline_mode<synchronous>, transform_indices = @transform_2, window_bounds = array<i64: 1, 384>}, {transform_indices = @transform_3, window_bounds = array<i64: 32, 384>}, {transform_indices = @transform_4, window_bounds = array<i64: 32, 128>}, {transform_indices = @transform_5, window_bounds = array<i64: 1, 8, 384>}, {transform_indices = @transform_6, window_bounds = array<i64: 1, 8, 128>}, {transform_indices = @transform_7, window_bounds = array<i64: 1, 8, 128>}]} {
    %c0_i32 = arith.constant 0 : i32
    %0 = arith.cmpi eq, %arg1, %c0_i32 : i32
    %1 = arith.extui %0 : i1 to i32
    %c0_i32_0 = arith.constant 0 : i32
    %2 = arith.cmpi ne, %1, %c0_i32_0 : i32
    scf.if %2 {
      %cst_33 = arith.constant 0.000000e+00 : f32
      %57 = vector.broadcast %cst_33 : f32 to vector<8x384xf32>
      %c0_34 = arith.constant 0 : index
      %c0_35 = arith.constant 0 : index
      %c0_36 = arith.constant 0 : index
      %58 = vector.load %arg7[%c0_34, %c0_35, %c0_36] : memref<1x8x384xf32, #tpu.memory_space<vmem>>, vector<1x8x384xf32>
      %59 = vector.shape_cast %58 : vector<1x8x384xf32> to vector<8x384xf32>
      %60 = vector.shape_cast %57 : vector<8x384xf32> to vector<1x8x384xf32>
      tpu.vector_store %arg7[%c0_34, %c0_35, %c0_36], %60 {strides = array<i32>} : memref<1x8x384xf32, #tpu.memory_space<vmem>>, vector<1x8x384xf32>,
      %cst_37 = arith.constant 0.000000e+00 : f32
      %61 = vector.broadcast %cst_37 : f32 to vector<8x128xf32>
      %c0_38 = arith.constant 0 : index
      %c0_39 = arith.constant 0 : index
      %c0_40 = arith.constant 0 : index
      %62 = vector.load %arg8[%c0_38, %c0_39, %c0_40] : memref<1x8x128xf32, #tpu.memory_space<vmem>>, vector<1x8x128xf32>
      %63 = vector.shape_cast %62 : vector<1x8x128xf32> to vector<8x128xf32>
      %64 = vector.shape_cast %61 : vector<8x128xf32> to vector<1x8x128xf32>
      tpu.vector_store %arg8[%c0_38, %c0_39, %c0_40], %64 {strides = array<i32>} : memref<1x8x128xf32, #tpu.memory_space<vmem>>, vector<1x8x128xf32>,
      %cst_41 = arith.constant 0.000000e+00 : f32
      %65 = vector.broadcast %cst_41 : f32 to vector<8x128xf32>
      %c0_42 = arith.constant 0 : index
      %c0_43 = arith.constant 0 : index
      %c0_44 = arith.constant 0 : index
      %66 = vector.load %arg9[%c0_42, %c0_43, %c0_44] : memref<1x8x128xf32, #tpu.memory_space<vmem>>, vector<1x8x128xf32>
      %67 = vector.shape_cast %66 : vector<1x8x128xf32> to vector<8x128xf32>
      %68 = vector.shape_cast %65 : vector<8x128xf32> to vector<1x8x128xf32>
      tpu.vector_store %arg9[%c0_42, %c0_43, %c0_44], %68 {strides = array<i32>} : memref<1x8x128xf32, #tpu.memory_space<vmem>>, vector<1x8x128xf32>,
    } else {
    }
    %c1_i32 = arith.constant 1 : i32
    %3 = arith.muli %arg0, %c1_i32 : i32
    %4 = arith.addi %3, %arg1 : i32
    %5 = tpu.iota {dimensions = array<i32: 0>} : vector<32x1xi32>
    %c32_i32 = arith.constant 32 : i32
    %6 = arith.muli %4, %c32_i32 : i32
    %7 = vector.broadcast %6 : i32 to vector<32x1xi32>
    %8 = arith.addi %7, %5 : vector<32x1xi32>
    %c32_i32_1 = arith.constant 32 : i32
    %9 = vector.broadcast %c32_i32_1 : i32 to vector<32x1xi32>
    %10 = arith.cmpi slt, %8, %9 : vector<32x1xi32>
    %c0 = arith.constant 0 : index
    %c0_2 = arith.constant 0 : index
    %11 = memref.load %arg2[%c0, %c0_2] : memref<1x1xf32, #tpu.memory_space<smem>>
    %c0_3 = arith.constant 0 : index
    %c0_4 = arith.constant 0 : index
    %12 = vector.load %arg5[%c0_3, %c0_4] : memref<32x384xf32, #tpu.memory_space<vmem>>, vector<32x384xf32>
    %13 = vector.broadcast %11 : f32 to vector<32x384xf32>
    %14 = arith.subf %12, %13 : vector<32x384xf32>
    %c0_5 = arith.constant 0 : index
    %c0_6 = arith.constant 0 : index
    %15 = vector.load %arg4[%c0_5, %c0_6] : memref<1x384xf32, #tpu.memory_space<vmem>>, vector<1x384xf32>
    %16 = arith.mulf %14, %14 : vector<32x384xf32>
    %17 = vector.broadcast %15 : vector<1x384xf32> to vector<32x384xf32>
    %18 = arith.mulf %17, %16 : vector<32x384xf32>
    %c0_7 = arith.constant 0 : index
    %c0_8 = arith.constant 0 : index
    %19 = vector.load %arg3[%c0_7, %c0_8] : memref<1x384xf32, #tpu.memory_space<vmem>>, vector<1x384xf32>
    %20 = vector.broadcast %19 : vector<1x384xf32> to vector<32x384xf32>
    %21 = arith.mulf %20, %12 : vector<32x384xf32>
    %22 = arith.addf %18, %21 : vector<32x384xf32>
    %cst = arith.constant 0.000000e+00 : f32
    %23 = vector.shape_cast %10 : vector<32x1xi1> to vector<32x1xi1>
    %24 = vector.broadcast %23 : vector<32x1xi1> to vector<32x384xi1>
    %25 = vector.broadcast %cst : f32 to vector<32x384xf32>
    %26 = arith.select %24, %22, %25 : vector<32x384xi1>, vector<32x384xf32>
    %c0_9 = arith.constant 0 : index
    %c0_10 = arith.constant 0 : index
    %c0_11 = arith.constant 0 : index
    %27 = vector.load %arg7[%c0_9, %c0_10, %c0_11] : memref<1x8x384xf32, #tpu.memory_space<vmem>>, vector<1x8x384xf32>
    %28 = vector.shape_cast %27 : vector<1x8x384xf32> to vector<8x384xf32>
    %29 = vector.shape_cast %26 : vector<32x384xf32> to vector<4x8x384xf32>
    %cst_12 = arith.constant dense<0.000000e+00> : vector<8x384xf32>
    %30 = vector.multi_reduction <add>, %29, %cst_12 [0] : vector<4x8x384xf32> to vector<8x384xf32>
    %31 = arith.addf %28, %30 : vector<8x384xf32>
    %c0_13 = arith.constant 0 : index
    %c0_14 = arith.constant 0 : index
    %c0_15 = arith.constant 0 : index
    %32 = vector.load %arg7[%c0_13, %c0_14, %c0_15] : memref<1x8x384xf32, #tpu.memory_space<vmem>>, vector<1x8x384xf32>
    %33 = vector.shape_cast %32 : vector<1x8x384xf32> to vector<8x384xf32>
    %34 = vector.shape_cast %31 : vector<8x384xf32> to vector<1x8x384xf32>
    tpu.vector_store %arg7[%c0_13, %c0_14, %c0_15], %34 {strides = array<i32>} : memref<1x8x384xf32, #tpu.memory_space<vmem>>, vector<1x8x384xf32>,
    %c0_16 = arith.constant 0 : index
    %c0_17 = arith.constant 0 : index
    %35 = vector.load %arg6[%c0_16, %c0_17] : memref<32x128xf32, #tpu.memory_space<vmem>>, vector<32x128xf32>
    %cst_18 = arith.constant 0.000000e+00 : f32
    %36 = vector.shape_cast %10 : vector<32x1xi1> to vector<32x1xi1>
    %37 = vector.broadcast %36 : vector<32x1xi1> to vector<32x128xi1>
    %38 = vector.broadcast %cst_18 : f32 to vector<32x128xf32>
    %39 = arith.select %37, %35, %38 : vector<32x128xi1>, vector<32x128xf32>
    %c0_19 = arith.constant 0 : index
    %c0_20 = arith.constant 0 : index
    %c0_21 = arith.constant 0 : index
    %40 = vector.load %arg8[%c0_19, %c0_20, %c0_21] : memref<1x8x128xf32, #tpu.memory_space<vmem>>, vector<1x8x128xf32>
    %41 = vector.shape_cast %40 : vector<1x8x128xf32> to vector<8x128xf32>
    %42 = vector.shape_cast %39 : vector<32x128xf32> to vector<4x8x128xf32>
    %cst_22 = arith.constant dense<0.000000e+00> : vector<8x128xf32>
    %43 = vector.multi_reduction <add>, %42, %cst_22 [0] : vector<4x8x128xf32> to vector<8x128xf32>
    %44 = arith.addf %41, %43 : vector<8x128xf32>
    %c0_23 = arith.constant 0 : index
    %c0_24 = arith.constant 0 : index
    %c0_25 = arith.constant 0 : index
    %45 = vector.load %arg8[%c0_23, %c0_24, %c0_25] : memref<1x8x128xf32, #tpu.memory_space<vmem>>, vector<1x8x128xf32>
    %46 = vector.shape_cast %45 : vector<1x8x128xf32> to vector<8x128xf32>
    %47 = vector.shape_cast %44 : vector<8x128xf32> to vector<1x8x128xf32>
    tpu.vector_store %arg8[%c0_23, %c0_24, %c0_25], %47 {strides = array<i32>} : memref<1x8x128xf32, #tpu.memory_space<vmem>>, vector<1x8x128xf32>,
    %c0_26 = arith.constant 0 : index
    %c0_27 = arith.constant 0 : index
    %c0_28 = arith.constant 0 : index
    %48 = vector.load %arg9[%c0_26, %c0_27, %c0_28] : memref<1x8x128xf32, #tpu.memory_space<vmem>>, vector<1x8x128xf32>
    %49 = vector.shape_cast %48 : vector<1x8x128xf32> to vector<8x128xf32>
    %50 = arith.mulf %39, %39 : vector<32x128xf32>
    %51 = vector.shape_cast %50 : vector<32x128xf32> to vector<4x8x128xf32>
    %cst_29 = arith.constant dense<0.000000e+00> : vector<8x128xf32>
    %52 = vector.multi_reduction <add>, %51, %cst_29 [0] : vector<4x8x128xf32> to vector<8x128xf32>
    %53 = arith.addf %49, %52 : vector<8x128xf32>
    %c0_30 = arith.constant 0 : index
    %c0_31 = arith.constant 0 : index
    %c0_32 = arith.constant 0 : index
    %54 = vector.load %arg9[%c0_30, %c0_31, %c0_32] : memref<1x8x128xf32, #tpu.memory_space<vmem>>, vector<1x8x128xf32>
    %55 = vector.shape_cast %54 : vector<1x8x128xf32> to vector<8x128xf32>
    %56 = vector.shape_cast %53 : vector<8x128xf32> to vector<1x8x128xf32>
    tpu.vector_store %arg9[%c0_30, %c0_31, %c0_32], %56 {strides = array<i32>} : memref<1x8x128xf32, #tpu.memory_space<vmem>>, vector<1x8x128xf32>,
    return
  }
  func.func @transform_0(%arg0: i32, %arg1: i32) -> (i32, i32) {
    %c0_i32 = arith.constant 0 : i32
    %c0_i32_0 = arith.constant 0 : i32
    %c0_i32_1 = arith.constant 0 : i32
    return %c0_i32, %c0_i32_0 : i32, i32
  }
  func.func @transform_1(%arg0: i32, %arg1: i32) -> (i32, i32) {
    %c0_i32 = arith.constant 0 : i32
    %c0_i32_0 = arith.constant 0 : i32
    %c0_i32_1 = arith.constant 0 : i32
    return %c0_i32, %c0_i32_0 : i32, i32
  }
  func.func @transform_2(%arg0: i32, %arg1: i32) -> (i32, i32) {
    %c0_i32 = arith.constant 0 : i32
    %c0_i32_0 = arith.constant 0 : i32
    %c0_i32_1 = arith.constant 0 : i32
    return %c0_i32, %c0_i32_0 : i32, i32
  }
  func.func @transform_3(%arg0: i32, %arg1: i32) -> (i32, i32) {
    %c1_i32 = arith.constant 1 : i32
    %0 = arith.muli %arg0, %c1_i32 : i32
    %1 = arith.addi %0, %arg1 : i32
    %c0_i32 = arith.constant 0 : i32
    %2 = arith.minsi %1, %c0_i32 : i32
    %c0_i32_0 = arith.constant 0 : i32
    %c0_i32_1 = arith.constant 0 : i32
    return %2, %c0_i32_0 : i32, i32
  }
  func.func @transform_4(%arg0: i32, %arg1: i32) -> (i32, i32) {
    %c1_i32 = arith.constant 1 : i32
    %0 = arith.muli %arg0, %c1_i32 : i32
    %1 = arith.addi %0, %arg1 : i32
    %c0_i32 = arith.constant 0 : i32
    %2 = arith.minsi %1, %c0_i32 : i32
    %c0_i32_0 = arith.constant 0 : i32
    %c0_i32_1 = arith.constant 0 : i32
    return %2, %c0_i32_0 : i32, i32
  }
  func.func @transform_5(%arg0: i32, %arg1: i32) -> (i32, i32, i32) {
    %c0_i32 = arith.constant 0 : i32
    %c0_i32_0 = arith.constant 0 : i32
    %c0_i32_1 = arith.constant 0 : i32
    return %arg0, %c0_i32, %c0_i32_0 : i32, i32, i32
  }
  func.func @transform_6(%arg0: i32, %arg1: i32) -> (i32, i32, i32) {
    %c0_i32 = arith.constant 0 : i32
    %c0_i32_0 = arith.constant 0 : i32
    %c0_i32_1 = arith.constant 0 : i32
    return %arg0, %c0_i32, %c0_i32_0 : i32, i32, i32
  }
  func.func @transform_7(%arg0: i32, %arg1: i32) -> (i32, i32, i32) {
    %c0_i32 = arith.constant 0 : i32
    %c0_i32_0 = arith.constant 0 : i32
    %c0_i32_1 = arith.constant 0 : i32
    return %arg0, %c0_i32, %c0_i32_0 : i32, i32, i32
  }
}

</mosaic_0001>

<llo_original>
// kernel: _reward_mse_pallas.1
$region0: #{_reward_mse_pallas.1}
  #allocation0 [shape = 'u32[]', space=smem, size = 0x4, offset = 0x4, fixed_abs, tag = 'smem constant byte address 0x4 - core index']
  #allocation1 [shape = 'u32[144,128]{1,0:T(1,128)}', space=vmem, size = 0x12000, scoped, tag = 'internal scratch']
  #allocation2 [shape = 'f32[1,1]{1,0:T(1,128)S(6)}', space=smem, size = 0x200, scoped, tag = 'scoped memory for _reward_mse_pallas.1']
  %s0 = inlined_call_operand.<no memory space> [shape: f32[1,1], index: 0, kind: input, shape index: {}]
  %s1 = inlined_call_operand.vmem [shape: f32[1,384], index: 1, kind: input, shape index: {}]
  %s2 = inlined_call_operand.vmem [shape: f32[1,384], index: 2, kind: input, shape index: {}]
  %s3 = inlined_call_operand.vmem [shape: f32[32,384], index: 3, kind: input, shape index: {}]
  %s4 = inlined_call_operand.vmem [shape: f32[32,128], index: 4, kind: input, shape index: {}]
  %s5 = inlined_call_operand.vmem [shape: f32[2,8,384], index: 5, kind: output, shape index: {0}]
  %s6 = inlined_call_operand.vmem [shape: f32[2,8,128], index: 6, kind: output, shape index: {1}]
  %s7 = inlined_call_operand.vmem [shape: f32[2,8,128], index: 7, kind: output, shape index: {2}]
  %8 = xla_tuple %s5, %s6, %s7
  %s9 = sld [smem:[#allocation0]]
  $region73: #{_reward_mse_pallas.1} parent=0
    _
  %s11 = ssub.s32 1, %s9
  %s12 = scalar_select 0, %s11, %s9
  %13 = sst [smem:[#allocation2]] %s0
  loop: start=0, step=1, limit=4
  $region2: #{_reward_mse_pallas.1} parent=0 // loop_pre_header
    _
  $region3: #{_reward_mse_pallas.1} parent=0 // loop_header
    %s15 = sphi 0, %s19
    %p16 = scmp.ge.s32.totalorder %s15, 4
    %s22 = sphi 0, %s34
    %s23 = sphi 0, %s30
    %s24 = sphi 0, %s22
    %s25 = sphi 0, %s23
    %s26 = sphi 0, %s24
    %s27 = sphi 0, %s25
    %s35 = sphi 0, %s35
    %s37 = sphi 0, %s35
    %s38 = sphi 0, %s37
    %s52 = sphi 0, %s38
    %s56 = sphi 0, %s56
    %s58 = sphi 0, %s56
    %s59 = sphi 0, %s58
    %s73 = sphi 0, %s59
    %s77 = sphi 0, %s77
    %s79 = sphi 0, %s77
    %s80 = sphi 0, %s79
    %s94 = sphi 0, %s80
    %s106 = sphi 0, %s108
    %s109 = sphi 0, %s106
    %s110 = sphi 0, %s109
    %s126 = sphi 0, %s110
    %s138 = sphi 0, %s140
    %s141 = sphi 0, %s138
    %s142 = sphi 0, %s141
    %s158 = sphi 0, %s142
    %s164 = sphi 0, %s166
    %s167 = sphi 0, %s164
    %s168 = sphi 0, %s167
    %s184 = sphi 0, %s168
    %s190 = sphi 0, %s192
    %s193 = sphi 0, %s190
    %s194 = sphi 0, %s193
    %s210 = sphi 0, %s194
    %s216 = sphi 0, %s218
    %s219 = sphi 0, %s216
    %s220 = sphi 0, %s219
    %s236 = sphi 0, %s220
  $region4: #{_reward_mse_pallas.1} parent=0 // loop_header_branch
    %18 = sbr.rel (%p16) target = $region8
  $region5: #{_reward_mse_pallas.1} parent=0 // loop_body
    %s20 = ssub.s32 %s15, 1
    %s21 = ssub.s32 %s15, 2
    %s28 = sadd.s32 1, %s23
    %p29 = scmp.ge.s32.totalorder %s28, 1
    %s30 = scalar_select %p29, 0, %s28
    %s31 = sadd.s32 1, %s22
    %s32 = scalar_select %p29, %s31, %s22
    %p33 = scmp.ge.s32.totalorder %s32, 2
    %s34 = scalar_select %p33, 0, %s32
    %s36 = sadd.s32 %s35, 1
    %p39 = scmp.eq.s32.totalorder %s15, 1
    %p40 = scmp.ne.s32.totalorder %s35, %s37
    %p41 = scmp.eq.s32.totalorder %s15, 0
    %p42 = por %p40, %p41
    %p43 = scmp.ne.s32.totalorder %s35, %s37
    %p44 = scmp.eq.s32.totalorder %s20, 1
    %p45 = por %p43, %p44
    %p46 = scmp.ne.s32.totalorder %s37, %s38
    %p47 = scmp.eq.s32.totalorder %s20, 0
    %p48 = por %p46, %p47
    %p49 = scmp.ne.s32.totalorder %s37, %s38
    %p50 = scmp.eq.s32.totalorder %s21, 1
    %p51 = por %p49, %p50
    %p53 = scmp.ne.s32.totalorder %s38, %s52
    %p54 = scmp.eq.s32.totalorder %s21, 0
    %p55 = por %p53, %p54
    %s57 = sadd.s32 %s56, 1
    %p60 = scmp.eq.s32.totalorder %s15, 1
    %p61 = scmp.ne.s32.totalorder %s56, %s58
    %p62 = scmp.eq.s32.totalorder %s15, 0
    %p63 = por %p61, %p62
    %p64 = scmp.ne.s32.totalorder %s56, %s58
    %p65 = scmp.eq.s32.totalorder %s20, 1
    %p66 = por %p64, %p65
    %p67 = scmp.ne.s32.totalorder %s58, %s59
    %p68 = scmp.eq.s32.totalorder %s20, 0
    %p69 = por %p67, %p68
    %p70 = scmp.ne.s32.totalorder %s58, %s59
    %p71 = scmp.eq.s32.totalorder %s21, 1
    %p72 = por %p70, %p71
    %p74 = scmp.ne.s32.totalorder %s59, %s73
    %p75 = scmp.eq.s32.totalorder %s21, 0
    %p76 = por %p74, %p75
    %s78 = sadd.s32 %s77, 1
    %p81 = scmp.eq.s32.totalorder %s15, 1
    %p82 = scmp.ne.s32.totalorder %s77, %s79
    %p83 = scmp.eq.s32.totalorder %s15, 0
    %p84 = por %p82, %p83
    %p85 = scmp.ne.s32.totalorder %s77, %s79
    %p86 = scmp.eq.s32.totalorder %s20, 1
    %p87 = por %p85, %p86
    %p88 = scmp.ne.s32.totalorder %s79, %s80
    %p89 = scmp.eq.s32.totalorder %s20, 0
    %p90 = por %p88, %p89
    %p91 = scmp.ne.s32.totalorder %s79, %s80
    %p92 = scmp.eq.s32.totalorder %s21, 1
    %p93 = por %p91, %p92
    %p95 = scmp.ne.s32.totalorder %s80, %s94
    %p96 = scmp.eq.s32.totalorder %s21, 0
    %p97 = por %p95, %p96
    %s98 = sadd.s32 %s22, %s23
    %p99 = scmp.lt.s32.totalorder %s98, 0
    %s100 = scalar_select %p99, %s98, 0
    %s101 = sadd.s32 %s34, %s30
    %p102 = scmp.lt.s32.totalorder %s101, 0
    %s103 = scalar_select %p102, %s101, 0
    %s104 = ssub.s32 %s100, %s103
    %p105 = scmp.eq.s32.totalorder %s104, 0
    %s107 = sadd.s32 %s106, 1
    %s108 = scalar_select %p105, %s106, %s107
    %p111 = pneg %p105
    %p112 = scmp.eq.s32.totalorder %s15, 1
    %p113 = por %p111, %p112
    %p114 = scmp.ne.s32.totalorder %s106, %s109
    %p115 = scmp.eq.s32.totalorder %s15, 0
    %p116 = por %p114, %p115
    %p117 = scmp.ne.s32.totalorder %s106, %s109
    %p118 = scmp.eq.s32.totalorder %s20, 1
    %p119 = por %p117, %p118
    %p120 = scmp.ne.s32.totalorder %s109, %s110
    %p121 = scmp.eq.s32.totalorder %s20, 0
    %p122 = por %p120, %p121
    %p123 = scmp.ne.s32.totalorder %s109, %s110
    %p124 = scmp.eq.s32.totalorder %s21, 1
    %p125 = por %p123, %p124
    %p127 = scmp.ne.s32.totalorder %s110, %s126
    %p128 = scmp.eq.s32.totalorder %s21, 0
    %p129 = por %p127, %p128
    %s130 = sadd.s32 %s22, %s23
    %p131 = scmp.lt.s32.totalorder %s130, 0
    %s132 = scalar_select %p131, %s130, 0
    %s133 = sadd.s32 %s34, %s30
    %p134 = scmp.lt.s32.totalorder %s133, 0
    %s135 = scalar_select %p134, %s133, 0
    %s136 = ssub.s32 %s132, %s135
    %p137 = scmp.eq.s32.totalorder %s136, 0
    %s139 = sadd.s32 %s138, 1
    %s140 = scalar_select %p137, %s138, %s139
    %p143 = pneg %p137
    %p144 = scmp.eq.s32.totalorder %s15, 1
    %p145 = por %p143, %p144
    %p146 = scmp.ne.s32.totalorder %s138, %s141
    %p147 = scmp.eq.s32.totalorder %s15, 0
    %p148 = por %p146, %p147
    %p149 = scmp.ne.s32.totalorder %s138, %s141
    %p150 = scmp.eq.s32.totalorder %s20, 1
    %p151 = por %p149, %p150
    %p152 = scmp.ne.s32.totalorder %s141, %s142
    %p153 = scmp.eq.s32.totalorder %s20, 0
    %p154 = por %p152, %p153
    %p155 = scmp.ne.s32.totalorder %s141, %s142
    %p156 = scmp.eq.s32.totalorder %s21, 1
    %p157 = por %p155, %p156
    %p159 = scmp.ne.s32.totalorder %s142, %s158
    %p160 = scmp.eq.s32.totalorder %s21, 0
    %p161 = por %p159, %p160
    %s162 = ssub.s32 %s22, %s34
    %p163 = scmp.eq.s32.totalorder %s162, 0
    %s165 = sadd.s32 %s164, 1
    %s166 = scalar_select %p163, %s164, %s165
    %p169 = pneg %p163
    %p170 = scmp.eq.s32.totalorder %s15, 1
    %p171 = por %p169, %p170
    %p172 = scmp.ne.s32.totalorder %s164, %s167
    %p173 = scmp.eq.s32.totalorder %s15, 0
    %p174 = por %p172, %p173
    %p175 = scmp.ne.s32.totalorder %s164, %s167
    %p176 = scmp.eq.s32.totalorder %s20, 1
    %p177 = por %p175, %p176
    %p178 = scmp.ne.s32.totalorder %s167, %s168
    %p179 = scmp.eq.s32.totalorder %s20, 0
    %p180 = por %p178, %p179
    %p181 = scmp.ne.s32.totalorder %s167, %s168
    %p182 = scmp.eq.s32.totalorder %s21, 1
    %p183 = por %p181, %p182
    %p185 = scmp.ne.s32.totalorder %s168, %s184
    %p186 = scmp.eq.s32.totalorder %s21, 0
    %p187 = por %p185, %p186
    %s188 = ssub.s32 %s22, %s34
    %p189 = scmp.eq.s32.totalorder %s188, 0
    %s191 = sadd.s32 %s190, 1
    %s192 = scalar_select %p189, %s190, %s191
    %p195 = pneg %p189
    %p196 = scmp.eq.s32.totalorder %s15, 1
    %p197 = por %p195, %p196
    %p198 = scmp.ne.s32.totalorder %s190, %s193
    %p199 = scmp.eq.s32.totalorder %s15, 0
    %p200 = por %p198, %p199
    %p201 = scmp.ne.s32.totalorder %s190, %s193
    %p202 = scmp.eq.s32.totalorder %s20, 1
    %p203 = por %p201, %p202
    %p204 = scmp.ne.s32.totalorder %s193, %s194
    %p205 = scmp.eq.s32.totalorder %s20, 0
    %p206 = por %p204, %p205
    %p207 = scmp.ne.s32.totalorder %s193, %s194
    %p208 = scmp.eq.s32.totalorder %s21, 1
    %p209 = por %p207, %p208
    %p211 = scmp.ne.s32.totalorder %s194, %s210
    %p212 = scmp.eq.s32.totalorder %s21, 0
    %p213 = por %p211, %p212
    %s214 = ssub.s32 %s22, %s34
    %p215 = scmp.eq.s32.totalorder %s214, 0
    %s217 = sadd.s32 %s216, 1
    %s218 = scalar_select %p215, %s216, %s217
    %p221 = pneg %p215
    %p222 = scmp.eq.s32.totalorder %s15, 1
    %p223 = por %p221, %p222
    %p224 = scmp.ne.s32.totalorder %s216, %s219
    %p225 = scmp.eq.s32.totalorder %s15, 0
    %p226 = por %p224, %p225
    %p227 = scmp.ne.s32.totalorder %s216, %s219
    %p228 = scmp.eq.s32.totalorder %s20, 1
    %p229 = por %p227, %p228
    %p230 = scmp.ne.s32.totalorder %s219, %s220
    %p231 = scmp.eq.s32.totalorder %s20, 0
    %p232 = por %p230, %p231
    %p233 = scmp.ne.s32.totalorder %s219, %s220
    %p234 = scmp.eq.s32.totalorder %s21, 1
    %p235 = por %p233, %p234
    %p237 = scmp.ne.s32.totalorder %s220, %s236
    %p238 = scmp.eq.s32.totalorder %s21, 0
    %p239 = por %p237, %p238
    %p240 = scmp.le.s32.totalorder 1, %s15
    %p241 = scmp.lt.s32.totalorder %s15, 3
    %p242 = pnand %p240, %p241
    %p243 = pneg %p242
    // Predicated region
    $region9: #{_reward_mse_pallas.1} parent=5 // pred_check
      _
    $region10: #{_reward_mse_pallas.1} parent=5 // pred_check_branch
      %245 = sbr.rel (%p242) target = $region12
    $region11: #{_reward_mse_pallas.1} parent=5 // pred_region
      %s246 = ssub.s32 %s15, 1
      // Predicated region
      $region13: #{_reward_mse_pallas.1} parent=11 // pred_check
        %p247 = pneg %p48
      $region14: #{_reward_mse_pallas.1} parent=11 // pred_check_branch
        %249 = sbr.rel (%p247) target = $region16
      $region15: #{_reward_mse_pallas.1} parent=11 // pred_region
        _
      $region16: #{_reward_mse_pallas.1} parent=11 // pred_fallthru
        _
      // Predicated region
      $region17: #{_reward_mse_pallas.1} parent=11 // pred_check
        %p250 = pneg %p69
      $region18: #{_reward_mse_pallas.1} parent=11 // pred_check_branch
        %252 = sbr.rel (%p250) target = $region20
      $region19: #{_reward_mse_pallas.1} parent=11 // pred_region
        _
      $region20: #{_reward_mse_pallas.1} parent=11 // pred_fallthru
        _
      // Predicated region
      $region21: #{_reward_mse_pallas.1} parent=11 // pred_check
        %p253 = pneg %p90
      $region22: #{_reward_mse_pallas.1} parent=11 // pred_check_branch
        %255 = sbr.rel (%p253) target = $region24
      $region23: #{_reward_mse_pallas.1} parent=11 // pred_region
        _
      $region24: #{_reward_mse_pallas.1} parent=11 // pred_fallthru
        _
    $region12: #{_reward_mse_pallas.1} parent=5 // pred_fallthru
      _
    %p256 = scmp.lt.s32.totalorder %s15, 2
    // Predicated region
    $region25: #{_reward_mse_pallas.1} parent=5 // pred_check
      %p257 = pneg %p256
    $region26: #{_reward_mse_pallas.1} parent=5 // pred_check_branch
      %259 = sbr.rel (%p257) target = $region28
    $region27: #{_reward_mse_pallas.1} parent=5 // pred_region
      // Predicated region
      $region29: #{_reward_mse_pallas.1} parent=27 // pred_check
        %p260 = pneg %p116
      $region30: #{_reward_mse_pallas.1} parent=27 // pred_check_branch
        %262 = sbr.rel (%p260) target = $region32
      $region31: #{_reward_mse_pallas.1} parent=27 // pred_region
        %s263 = sadd.s32 %s22, %s23
        %p264 = scmp.lt.s32.totalorder %s263, 0
        %s265 = scalar_select %p264, %s263, 0
        %s266 = smul.u32 4, %s265
        %p267 = scmp.lt.s32.totalorder %s266, 3
        %s268 = scalar_select %p267, %s266, 3
        %s269 = smul.addr %s268, 3
        %s270 = smul.addr %s269, 8
        %s271 = scalar_lea.vmem %s3, %s270
        %s272 = sadd.s32 %s22, %s23
        %p273 = scmp.lt.s32.totalorder %s272, 0
        %s274 = scalar_select %p273, %s272, 0
        %s275 = smul.u32 4, %s274
      $region32: #{_reward_mse_pallas.1} parent=27 // pred_fallthru
        _
      // Predicated region
      $region33: #{_reward_mse_pallas.1} parent=27 // pred_check
        %p276 = pneg %p148
      $region34: #{_reward_mse_pallas.1} parent=27 // pred_check_branch
        %278 = sbr.rel (%p276) target = $region36
      $region35: #{_reward_mse_pallas.1} parent=27 // pred_region
        %s279 = sadd.s32 %s22, %s23
        %p280 = scmp.lt.s32.totalorder %s279, 0
        %s281 = scalar_select %p280, %s279, 0
        %s282 = smul.u32 4, %s281
        %p283 = scmp.lt.s32.totalorder %s282, 3
        %s284 = scalar_select %p283, %s282, 3
        %s285 = smul.addr %s284, 8
        %s286 = scalar_lea.vmem %s4, %s285
        %s287 = sadd.s32 %s22, %s23
        %p288 = scmp.lt.s32.totalorder %s287, 0
        %s289 = scalar_select %p288, %s287, 0
        %s290 = smul.u32 4, %s289
      $region36: #{_reward_mse_pallas.1} parent=27 // pred_fallthru
        _
    $region28: #{_reward_mse_pallas.1} parent=5 // pred_fallthru
      _
    %p291 = scmp.le.s32.totalorder 1, %s15
    %p292 = scmp.lt.s32.totalorder %s15, 3
    %p293 = pnand %p291, %p292
    %p294 = pneg %p293
    // Predicated region
    $region37: #{_reward_mse_pallas.1} parent=5 // pred_check
      _
    $region38: #{_reward_mse_pallas.1} parent=5 // pred_check_branch
      %296 = sbr.rel (%p293) target = $region40
    $region39: #{_reward_mse_pallas.1} parent=5 // pred_region
      %s297 = ssub.s32 %s15, 1
      %p298 = pneg %p48
      %p299 = pneg %p45
      %p300 = pneg %p69
      %p301 = pneg %p66
      %p302 = pneg %p90
      %p303 = pneg %p87
      %s304 = sadd.s32 %s24, %s25
      %p305 = scmp.lt.s32.totalorder %s304, 0
      %s306 = scalar_select %p305, %s304, 0
      %s307 = smul.u32 4, %s306
      %p308 = scmp.lt.s32.totalorder %s307, 3
      %s309 = scalar_select %p308, %s307, 3
      %s310 = smul.addr %s309, 3
      %s311 = smul.addr %s310, 8
      %s312 = scalar_lea.vmem %s3, %s311
      %p313 = pneg %p122
      %p314 = pneg %p119
      %s315 = sadd.s32 %s24, %s25
      %p316 = scmp.lt.s32.totalorder %s315, 0
      %s317 = scalar_select %p316, %s315, 0
      %s318 = smul.u32 4, %s317
      %p319 = scmp.lt.s32.totalorder %s318, 3
      %s320 = scalar_select %p319, %s318, 3
      %s321 = smul.addr %s320, 8
      %s322 = scalar_lea.vmem %s4, %s321
      %p323 = pneg %p154
      %p324 = pneg %p151
      %p325 = pneg %p180
      %p326 = pneg %p177
      %p327 = scmp.lt.s32.totalorder %s24, 1
      %s328 = scalar_select %p327, %s24, 1
      %s329 = smul.addr %s328, 3
      %s330 = smul.addr %s329, 8
      %s331 = scalar_lea.vmem %s5, %s330
      %p332 = pneg %p206
      %p333 = pneg %p203
      %p334 = scmp.lt.s32.totalorder %s24, 1
      %s335 = scalar_select %p334, %s24, 1
      %s336 = smul.addr %s335, 8
      %s337 = scalar_lea.vmem %s6, %s336
      %p338 = pneg %p232
      %p339 = pneg %p229
      %p340 = scmp.lt.s32.totalorder %s24, 1
      %s341 = scalar_select %p340, %s24, 1
      %s342 = smul.addr %s341, 8
      %s343 = scalar_lea.vmem %s7, %s342
      %s344 = sadd.s32 %s24, %s25
      %p345 = scmp.lt.s32.totalorder %s344, 0
      %s346 = scalar_select %p345, %s344, 0
      %s347 = smul.u32 4, %s346
      %p348 = scmp.lt.s32.totalorder %s347, 3
      %s349 = scalar_select %p348, %s347, 3
      %s350 = smul.addr %s349, 3
      %s351 = smul.addr %s350, 8
      %s352 = scalar_lea.vmem %s3, %s351
      %s353 = sadd.s32 %s24, %s25
      %p354 = scmp.lt.s32.totalorder %s353, 0
      %s355 = scalar_select %p354, %s353, 0
      %s356 = smul.u32 4, %s355
      %s357 = sadd.s32 %s24, %s25
      %p358 = scmp.lt.s32.totalorder %s357, 0
      %s359 = scalar_select %p358, %s357, 0
      %s360 = smul.u32 4, %s359
      %p361 = scmp.lt.s32.totalorder %s360, 3
      %s362 = scalar_select %p361, %s360, 3
      %s363 = smul.addr %s362, 8
      %s364 = scalar_lea.vmem %s4, %s363
      %s365 = sadd.s32 %s24, %s25
      %p366 = scmp.lt.s32.totalorder %s365, 0
      %s367 = scalar_select %p366, %s365, 0
      %s368 = smul.u32 4, %s367
      %p369 = scmp.lt.s32.totalorder %s24, 1
      %s370 = scalar_select %p369, %s24, 1
      %s371 = smul.addr %s370, 3
      %s372 = smul.addr %s371, 8
      %s373 = scalar_lea.vmem %s5, %s372
      %p374 = scmp.lt.s32.totalorder %s24, 1
      %s375 = scalar_select %p374, %s24, 1
      %s376 = smul.addr %s375, 8
      %s377 = scalar_lea.vmem %s6, %s376
      %p378 = scmp.lt.s32.totalorder %s24, 1
      %s379 = scalar_select %p378, %s24, 1
      %s380 = smul.addr %s379, 8
      %s381 = scalar_lea.vmem %s7, %s380
      %p382 = scmp.eq.s32.totalorder %s25, 0
      // Predicated region
      $region41: #{_reward_mse_pallas.1} parent=39 // pred_check
        %p383 = pneg %p382
      $region42: #{_reward_mse_pallas.1} parent=39 // pred_check_branch
        %385 = sbr.rel (%p383) target = $region44
      $region43: #{_reward_mse_pallas.1} parent=39 // pred_region
        %386 = vst [vmem:[%s373] sm:$0xff] 0.0
        %387 = vst [vmem:[%s373 + $0x8] sm:$0xff] 0.0
        %388 = vst [vmem:[%s373 + $0x10] sm:$0xff] 0.0
        %389 = vst [vmem:[%s377] sm:$0xff] 0.0
        %390 = vst [vmem:[%s381] sm:$0xff] 0.0
      $region44: #{_reward_mse_pallas.1} parent=39 // pred_fallthru
        _
      %s391 = sadd.s32 %s24, %s25
      %v392 = vlaneseq
      %v393 = vshrl.u32 %v392, 7
      %v394 = vadd.s32 %v393, 8
      %v395 = vadd.s32 %v393, 16
      %v396 = vadd.s32 %v393, 24
      %s397 = smul.u32 %s391, 32
      %v398 = vstv %s397
      %v399 = vadd.s32 %v398, %v393
      %v400 = vadd.s32 %v398, %v394
      %v401 = vadd.s32 %v398, %v395
      %v402 = vadd.s32 %v398, %v396
      %vm403 = vcmp.lt.s32.totalorder %v399, 32
      %vm404 = vcmp.lt.s32.totalorder %v400, 32
      %vm405 = vcmp.lt.s32.totalorder %v401, 32
      %vm406 = vcmp.lt.s32.totalorder %v402, 32
      %s407 = sld [smem:[#allocation2]]
      %v408 = vld [vmem:[%s352] sm:$0xff]
      %v409 = vld [vmem:[%s352 + $0x8] sm:$0xff]
      %v410 = vld [vmem:[%s352 + $0x10] sm:$0xff]
      %v411 = vld [vmem:[%s352 + $0x18] sm:$0xff]
      %v412 = vld [vmem:[%s352 + $0x20] sm:$0xff]
      %v413 = vld [vmem:[%s352 + $0x28] sm:$0xff]
      %v414 = vld [vmem:[%s352 + $0x30] sm:$0xff]
      %v415 = vld [vmem:[%s352 + $0x38] sm:$0xff]
      %v416 = vld [vmem:[%s352 + $0x40] sm:$0xff]
      %v417 = vld [vmem:[%s352 + $0x48] sm:$0xff]
      %v418 = vld [vmem:[%s352 + $0x50] sm:$0xff]
      %v419 = vld [vmem:[%s352 + $0x58] sm:$0xff]
      %v420 = vstv %s407
      %v421 = vsub.f32 %v408, %v420
      %v422 = vsub.f32 %v409, %v420
      %v423 = vsub.f32 %v410, %v420
      %v424 = vsub.f32 %v411, %v420
      %v425 = vsub.f32 %v412, %v420
      %v426 = vsub.f32 %v413, %v420
      %v427 = vsub.f32 %v414, %v420
      %v428 = vsub.f32 %v415, %v420
      %v429 = vsub.f32 %v416, %v420
      %v430 = vsub.f32 %v417, %v420
      %v431 = vsub.f32 %v418, %v420
      %v432 = vsub.f32 %v419, %v420
      %v433 = vld [vmem:[%s2] sm:$0x7]
      %v434 = vmul.f32 %v421, %v421
      %v435 = vmul.f32 %v422, %v422
      %v436 = vmul.f32 %v423, %v423
      %v437 = vmul.f32 %v424, %v424
      %v438 = vmul.f32 %v425, %v425
      %v439 = vmul.f32 %v426, %v426
      %v440 = vmul.f32 %v427, %v427
      %v441 = vmul.f32 %v428, %v428
      %v442 = vmul.f32 %v429, %v429
      %v443 = vmul.f32 %v430, %v430
      %v444 = vmul.f32 %v431, %v431
      %v445 = vmul.f32 %v432, %v432
      %v447 = vlaneseq
      %v448 = vshrl.u32 %v447, 7
      %v449 = vsub.s32 0, %v448
      %v450 = vrot.slane %v433, %v449
      %v451 = vlaneseq
      %v452 = vshrl.u32 %v451, 7
      %v453 = vsub.s32 1, %v452
      %v454 = vrot.slane %v433, %v453
      %v455 = vlaneseq
      %v456 = vshrl.u32 %v455, 7
      %v457 = vsub.s32 2, %v456
      %v458 = vrot.slane %v433, %v457
      %v462 = vmul.f32 %v450, %v434
      %v463 = vmul.f32 %v454, %v435
      %v464 = vmul.f32 %v458, %v436
      %v465 = vmul.f32 %v450, %v437
      %v466 = vmul.f32 %v454, %v438
      %v467 = vmul.f32 %v458, %v439
      %v468 = vmul.f32 %v450, %v440
      %v469 = vmul.f32 %v454, %v441
      %v470 = vmul.f32 %v458, %v442
      %v471 = vmul.f32 %v450, %v443
      %v472 = vmul.f32 %v454, %v444
      %v473 = vmul.f32 %v458, %v445
      %v474 = vld [vmem:[%s1] sm:$0x7]
      %v476 = vlaneseq
      %v477 = vshrl.u32 %v476, 7
      %v478 = vsub.s32 0, %v477
      %v479 = vrot.slane %v474, %v478
      %v480 = vlaneseq
      %v481 = vshrl.u32 %v480, 7
      %v482 = vsub.s32 1, %v481
      %v483 = vrot.slane %v474, %v482
      %v484 = vlaneseq
      %v485 = vshrl.u32 %v484, 7
      %v486 = vsub.s32 2, %v485
      %v487 = vrot.slane %v474, %v486
      %v491 = vmul.f32 %v479, %v408
      %v492 = vmul.f32 %v483, %v409
      %v493 = vmul.f32 %v487, %v410
      %v494 = vmul.f32 %v479, %v411
      %v495 = vmul.f32 %v483, %v412
      %v496 = vmul.f32 %v487, %v413
      %v497 = vmul.f32 %v479, %v414
      %v498 = vmul.f32 %v483, %v415
      %v499 = vmul.f32 %v487, %v416
      %v500 = vmul.f32 %v479, %v417
      %v501 = vmul.f32 %v483, %v418
      %v502 = vmul.f32 %v487, %v419
      %v503 = vadd.f32 %v462, %v491
      %v504 = vadd.f32 %v463, %v492
      %v505 = vadd.f32 %v464, %v493
      %v506 = vadd.f32 %v465, %v494
      %v507 = vadd.f32 %v466, %v495
      %v508 = vadd.f32 %v467, %v496
      %v509 = vadd.f32 %v468, %v497
      %v510 = vadd.f32 %v469, %v498
      %v511 = vadd.f32 %v470, %v499
      %v512 = vadd.f32 %v471, %v500
      %v513 = vadd.f32 %v472, %v501
      %v514 = vadd.f32 %v473, %v502
      %v515 = vsel %vm403, 1, 0
      %v516 = vsel %vm404, 1, 0
      %v517 = vsel %vm405, 1, 0
      %v518 = vsel %vm406, 1, 0
      %vm519 = vcmp.eq.s32.totalorder %v515, 1
      %vm520 = vcmp.eq.s32.totalorder %v516, 1
      %vm521 = vcmp.eq.s32.totalorder %v517, 1
      %vm522 = vcmp.eq.s32.totalorder %v518, 1
      %v523 = vsel %vm519, %v503, 0.0
      %v524 = vsel %vm519, %v504, 0.0
      %v525 = vsel %vm519, %v505, 0.0
      %v526 = vsel %vm520, %v506, 0.0
      %v527 = vsel %vm520, %v507, 0.0
      %v528 = vsel %vm520, %v508, 0.0
      %v529 = vsel %vm521, %v509, 0.0
      %v530 = vsel %vm521, %v510, 0.0
      %v531 = vsel %vm521, %v511, 0.0
      %v532 = vsel %vm522, %v512, 0.0
      %v533 = vsel %vm522, %v513, 0.0
      %v534 = vsel %vm522, %v514, 0.0
      %v535 = vld [vmem:[%s373] sm:$0xff]
      %v536 = vld [vmem:[%s373 + $0x8] sm:$0xff]
      %v537 = vld [vmem:[%s373 + $0x10] sm:$0xff]
      %v538 = vadd.f32 %v523, %v526
      %v539 = vadd.f32 %v538, %v529
      %v540 = vadd.f32 %v539, %v532
      %v541 = vadd.f32 %v524, %v527
      %v542 = vadd.f32 %v541, %v530
      %v543 = vadd.f32 %v542, %v533
      %v544 = vadd.f32 %v525, %v528
      %v545 = vadd.f32 %v544, %v531
      %v546 = vadd.f32 %v545, %v534
      %v547 = vadd.f32 %v535, %v540
      %v548 = vadd.f32 %v536, %v543
      %v549 = vadd.f32 %v537, %v546
      %550 = vst [vmem:[%s373] sm:$0xff] %v547
      %551 = vst [vmem:[%s373 + $0x8] sm:$0xff] %v548
      %552 = vst [vmem:[%s373 + $0x10] sm:$0xff] %v549
      %v553 = vld [vmem:[%s364] sm:$0xff]
      %v554 = vld [vmem:[%s364 + $0x8] sm:$0xff]
      %v555 = vld [vmem:[%s364 + $0x10] sm:$0xff]
      %v556 = vld [vmem:[%s364 + $0x18] sm:$0xff]
      %v557 = vsel %vm519, %v553, 0.0
      %v558 = vsel %vm520, %v554, 0.0
      %v559 = vsel %vm521, %v555, 0.0
      %v560 = vsel %vm522, %v556, 0.0
      %v561 = vld [vmem:[%s377] sm:$0xff]
      %v562 = vadd.f32 %v557, %v558
      %v563 = vadd.f32 %v562, %v559
      %v564 = vadd.f32 %v563, %v560
      %v565 = vadd.f32 %v561, %v564
      %566 = vst [vmem:[%s377] sm:$0xff] %v565
      %v567 = vld [vmem:[%s381] sm:$0xff]
      %v568 = vmul.f32 %v557, %v557
      %v569 = vmul.f32 %v558, %v558
      %v570 = vmul.f32 %v559, %v559
      %v571 = vmul.f32 %v560, %v560
      %v572 = vadd.f32 %v568, %v569
      %v573 = vadd.f32 %v572, %v570
      %v574 = vadd.f32 %v573, %v571
      %v575 = vadd.f32 %v567, %v574
      %576 = vst [vmem:[%s381] sm:$0xff] %v575
      %p577 = scmp.lt.s32.totalorder %s24, 1
      %s578 = scalar_select %p577, %s24, 1
      %s579 = smul.addr %s578, 3
      %s580 = smul.addr %s579, 8
      %s581 = scalar_lea.vmem %s5, %s580
      %p582 = scmp.lt.s32.totalorder %s24, 1
      %s583 = scalar_select %p582, %s24, 1
      %s584 = smul.addr %s583, 8
      %s585 = scalar_lea.vmem %s6, %s584
      %p586 = scmp.lt.s32.totalorder %s24, 1
      %s587 = scalar_select %p586, %s24, 1
      %s588 = smul.addr %s587, 8
      %s589 = scalar_lea.vmem %s7, %s588
      // Predicated region
      $region45: #{_reward_mse_pallas.1} parent=39 // pred_check
        %p590 = pneg %p177
      $region46: #{_reward_mse_pallas.1} parent=39 // pred_check_branch
        %592 = sbr.rel (%p590) target = $region48
      $region47: #{_reward_mse_pallas.1} parent=39 // pred_region
        _
      $region48: #{_reward_mse_pallas.1} parent=39 // pred_fallthru
        _
      // Predicated region
      $region49: #{_reward_mse_pallas.1} parent=39 // pred_check
        %p593 = pneg %p203
      $region50: #{_reward_mse_pallas.1} parent=39 // pred_check_branch
        %595 = sbr.rel (%p593) target = $region52
      $region51: #{_reward_mse_pallas.1} parent=39 // pred_region
        _
      $region52: #{_reward_mse_pallas.1} parent=39 // pred_fallthru
        _
      // Predicated region
      $region53: #{_reward_mse_pallas.1} parent=39 // pred_check
        %p596 = pneg %p229
      $region54: #{_reward_mse_pallas.1} parent=39 // pred_check_branch
        %598 = sbr.rel (%p596) target = $region56
      $region55: #{_reward_mse_pallas.1} parent=39 // pred_region
        _
      $region56: #{_reward_mse_pallas.1} parent=39 // pred_fallthru
        _
    $region40: #{_reward_mse_pallas.1} parent=5 // pred_fallthru
      _
    %p599 = scmp.le.s32.totalorder 2, %s15
    // Predicated region
    $region57: #{_reward_mse_pallas.1} parent=5 // pred_check
      %p600 = pneg %p599
    $region58: #{_reward_mse_pallas.1} parent=5 // pred_check_branch
      %602 = sbr.rel (%p600) target = $region60
    $region59: #{_reward_mse_pallas.1} parent=5 // pred_region
      %s603 = ssub.s32 %s15, 2
      // Predicated region
      $region61: #{_reward_mse_pallas.1} parent=59 // pred_check
        %p604 = pneg %p183
      $region62: #{_reward_mse_pallas.1} parent=59 // pred_check_branch
        %606 = sbr.rel (%p604) target = $region64
      $region63: #{_reward_mse_pallas.1} parent=59 // pred_region
        %p607 = scmp.lt.s32.totalorder %s26, 1
        %s608 = scalar_select %p607, %s26, 1
        %s609 = smul.addr %s608, 3
        %s610 = smul.addr %s609, 8
        %s611 = scalar_lea.vmem %s5, %s610
      $region64: #{_reward_mse_pallas.1} parent=59 // pred_fallthru
        _
      // Predicated region
      $region65: #{_reward_mse_pallas.1} parent=59 // pred_check
        %p612 = pneg %p209
      $region66: #{_reward_mse_pallas.1} parent=59 // pred_check_branch
        %614 = sbr.rel (%p612) target = $region68
      $region67: #{_reward_mse_pallas.1} parent=59 // pred_region
        %p615 = scmp.lt.s32.totalorder %s26, 1
        %s616 = scalar_select %p615, %s26, 1
        %s617 = smul.addr %s616, 8
        %s618 = scalar_lea.vmem %s6, %s617
      $region68: #{_reward_mse_pallas.1} parent=59 // pred_fallthru
        _
      // Predicated region
      $region69: #{_reward_mse_pallas.1} parent=59 // pred_check
        %p619 = pneg %p235
      $region70: #{_reward_mse_pallas.1} parent=59 // pred_check_branch
        %621 = sbr.rel (%p619) target = $region72
      $region71: #{_reward_mse_pallas.1} parent=59 // pred_region
        %p622 = scmp.lt.s32.totalorder %s26, 1
        %s623 = scalar_select %p622, %s26, 1
        %s624 = smul.addr %s623, 8
        %s625 = scalar_lea.vmem %s7, %s624
      $region72: #{_reward_mse_pallas.1} parent=59 // pred_fallthru
        _
    $region60: #{_reward_mse_pallas.1} parent=5 // pred_fallthru
      _
  $region6: #{_reward_mse_pallas.1} parent=0 // loop_footer
    %s19 = sadd.s32 1, %s15
  $region7: #{_reward_mse_pallas.1} parent=0 // loop_footer_branch
    %14 = sbr.rel target = $region3
  $region8: #{_reward_mse_pallas.1} parent=0 // loop_exit
    _

</llo_original>
